<compile_context>
chip_gen: v6e
topology: v6e:2x2x1
jax: 0.10.0
libtpu: 0.0.40
codegen_flags: <defaults>
</compile_context>

<pallas_src>
import functools
import math

import jax
import jax.numpy as jnp
from jax.experimental import pallas as pl
from jax.experimental.pallas import tpu as pltpu


def _round_up(x, m):
    return ((x + m - 1) // m) * m


def _tpu_generation():
    try:
        kind = jax.devices()[0].device_kind.lower()
    except Exception:
        return 0
    for g in (7, 6, 5, 4):
        if f"v{g}" in kind:
            return g
    return 0


def _vmem_plan():
    """(resident-path VMEM budget, vmem_limit_bytes or None, tiled-path (tm,tn,tk))."""
    g = _tpu_generation()
    if g >= 7:   # v7x: 64 MiB physical, 32 MiB scoped default -> stay under it.
        return 24 << 20, None, (512, 512, 1024)
    if g == 6:   # v6e: 128 MiB physical -> raise scoped limit, larger tiles.
        return 80 << 20, 100 << 20, (512, 1024, 1024)
    if g == 5:   # v5e: 128 MiB physical, 16 MiB scoped default; prioritize tm.
        return 48 << 20, 64 << 20, (512, 256, 512)
    return 12 << 20, None, (256, 256, 512)   # unknown generation: conservative.


# ---------------------------------------------------------------------------
# Primary path: fused MLP (group) kernel — grid over M only, weights resident.
# ---------------------------------------------------------------------------

def _fused_mlp_kernel(x_ref, *refs, prelu_flags):
    """refs = (w_0, b_0, ..., w_{L-1}, b_{L-1}, alphas_ref, o_ref)."""
    n_layers = len(prelu_flags)
    alpha_ref = refs[2 * n_layers]
    o_ref = refs[2 * n_layers + 1]

    h = x_ref[...].astype(jnp.float32)
    for li in range(n_layers):
        w = refs[2 * li][...]
        b = refs[2 * li + 1][...].astype(jnp.float32)      # (1, N_li), hoisted
        h = jnp.dot(h, w, preferred_element_type=jnp.float32) + b
        if prelu_flags[li]:
            a = alpha_ref[li]                              # scalar PReLU slope (SMEM)
            h = jnp.where(h > 0, h, a * h)
    o_ref[...] = h.astype(o_ref.dtype)


def _group_vmem_bytes(k_in, layer_shapes, tm):
    """Rough VMEM footprint of a fused group (weights counted x2 for buffering)."""
    w_bytes = sum(ci * co * 4 for ci, co in layer_shapes)
    b_bytes = sum(co * 4 for _, co in layer_shapes)
    widths = [k_in] + [co for _, co in layer_shapes]
    act_bytes = 3 * tm * max(widths) * 4                   # live f32 intermediates
    io_bytes = 2 * tm * k_in * 4 + 2 * tm * layer_shapes[-1][1] * 4
    return 2 * (w_bytes + b_bytes) + act_bytes + io_bytes


def _mlp_fused_group(x, group, *, first_layer, n_total, tm, vmem_limit):
    M, K0 = x.shape
    n = len(group)
    n_out = group[-1][0].shape[1]
    prelu_flags = tuple((first_layer + li + 1) != n_total for li in range(n))

    alphas = jnp.stack([
        a.astype(jnp.float32) if prelu_flags[li] else jnp.zeros((), jnp.float32)
        for li, (_, _, a) in enumerate(group)])

    in_specs = [pl.BlockSpec((tm, K0), lambda i: (i, 0))]             # x tile
    inputs = [x]
    for w, b, _ in group:
        kin, nout = w.shape
        in_specs.append(pl.BlockSpec((kin, nout), lambda i: (0, 0)))  # resident W
        in_specs.append(pl.BlockSpec((1, nout), lambda i: (0, 0)))    # resident b
        inputs += [w, b.reshape(1, nout)]
    in_specs.append(pl.BlockSpec(memory_space=pltpu.MemorySpace.SMEM))  # PReLU alphas
    inputs.append(alphas)

    compiler_kwargs = dict(dimension_semantics=("parallel",))
    if vmem_limit is not None:
        compiler_kwargs["vmem_limit_bytes"] = vmem_limit

    flops = sum(2 * M * w.shape[0] * w.shape[1] for w, _, _ in group)
    bytes_accessed = 4 * (M * K0 + sum(w.size + b.size for w, b, _ in group) + M * n_out)

    return pl.pallas_call(
        functools.partial(_fused_mlp_kernel, prelu_flags=prelu_flags),
        out_shape=jax.ShapeDtypeStruct((M, n_out), x.dtype),
        grid_spec=pltpu.PrefetchScalarGridSpec(
            num_scalar_prefetch=0,
            grid=(pl.cdiv(M, tm),),
            in_specs=in_specs,
            out_specs=pl.BlockSpec((tm, n_out), lambda i: (i, 0)),
        ),
        compiler_params=pltpu.CompilerParams(**compiler_kwargs),
        cost_estimate=pl.CostEstimate(flops=flops, transcendentals=0,
                                      bytes_accessed=bytes_accessed),
    )(*inputs)


# ---------------------------------------------------------------------------
# Fallback path: tiled (M, N, K) matmul for layers too large to hold resident.
# Accumulates directly in the resident f32 output tile (no VMEM scratch).
# ---------------------------------------------------------------------------

def _dense_tiled_kernel(x_ref, w_ref, b_ref, alpha_ref, o_ref, *, apply_prelu):
    k = pl.program_id(2)

    @pl.when(k == 0)
    def _():
        o_ref[...] = jnp.zeros_like(o_ref)

    o_ref[...] += jnp.dot(x_ref[...], w_ref[...], preferred_element_type=jnp.float32)

    @pl.when(k == pl.num_programs(2) - 1)
    def _():
        y = o_ref[...] + b_ref[...]
        if apply_prelu:
            a = alpha_ref[0]
            y = jnp.where(y > 0, y, a * y)
        o_ref[...] = y


def dense_tiled(x, w, b, alpha, *, apply_prelu, tiles):
    """y = act(x @ w + b) for very large layers; only this path pads/slices."""
    assert x.dtype == jnp.float32, "tiled fallback accumulates in the f32 output tile"
    M, K = x.shape
    _, N = w.shape
    tm_cap, tn_cap, tk_cap = tiles
    tm = tm_cap if M >= tm_cap else _round_up(M, 8)
    tn = tn_cap if N >= tn_cap else _round_up(N, 128)
    tk = tk_cap if K >= tk_cap else _round_up(K, 128)

    Mp, Kp, Np = _round_up(M, tm), _round_up(K, tk), _round_up(N, tn)
    # K must be zero-padded (garbage in the reduction dim corrupts the sum); this
    # path only triggers for very large layers, so the one-off pad is amortized.
    xp = x if (Mp, Kp) == (M, K) else jnp.pad(x, ((0, Mp - M), (0, Kp - K)))
    wp = w if (Kp, Np) == (K, N) else jnp.pad(w, ((0, Kp - K), (0, Np - N)))
    bp = (b if Np == N else jnp.pad(b, (0, Np - N))).reshape(1, Np)
    ap = jnp.asarray(alpha, jnp.float32).reshape(1)

    grid = (Mp // tm, Np // tn, Kp // tk)
    out = pl.pallas_call(
        functools.partial(_dense_tiled_kernel, apply_prelu=apply_prelu),
        out_shape=jax.ShapeDtypeStruct((Mp, Np), jnp.float32),
        grid_spec=pltpu.PrefetchScalarGridSpec(
            num_scalar_prefetch=0,
            grid=grid,
            in_specs=[
                pl.BlockSpec((tm, tk), lambda i, j, k: (i, k)),       # x tile
                pl.BlockSpec((tk, tn), lambda i, j, k: (k, j)),       # w tile
                pl.BlockSpec((1, tn), lambda i, j, k: (0, j)),        # bias tile
                pl.BlockSpec(memory_space=pltpu.MemorySpace.SMEM),    # PReLU alpha
            ],
            out_specs=pl.BlockSpec((tm, tn), lambda i, j, k: (i, j)),
        ),
        compiler_params=pltpu.CompilerParams(
            dimension_semantics=("parallel", "parallel", "arbitrary")),
        cost_estimate=pl.CostEstimate(
            flops=2 * Mp * Np * Kp,
            transcendentals=0,
            # include x/w re-stream factors (Np//tn and Mp//tm)
            bytes_accessed=(Mp * Kp * (Np // tn) + Kp * Np * (Mp // tm) + Mp * Np) * 4),
    )(xp, wp, bp, ap)
    return out[:M, :N] if (Mp, Np) != (M, N) else out


# ---------------------------------------------------------------------------
# Module-level forward / params / reference
# ---------------------------------------------------------------------------

def init_mlp_params(key, c_dim_list, dtype=jnp.float32):
    """Per-layer (W, b, prelu_alpha); W stored as (in_dim, out_dim)."""
    params = []
    for c_in, c_out in zip(c_dim_list[:-1], c_dim_list[1:]):
        key, kw, kb = jax.random.split(key, 3)
        bound = 1.0 / math.sqrt(c_in)
        w = jax.random.uniform(kw, (c_in, c_out), dtype, -bound, bound)
        b = jax.random.uniform(kb, (c_out,), dtype, -bound, bound)
        alpha = jnp.asarray(0.25, dtype)   # nn.PReLU default init
        params.append((w, b, alpha))
    return params


def mlp_simple_forward(x, params):
    """MLP_simple.forward: Linear -> PReLU per layer, last layer has no activation."""
    n_layers = len(params)
    budget, vmem_limit, tiles = _vmem_plan()
    M = x.shape[0]
    tm = min(M, 512)    # full-dim block for small batches, else 512-row tiles

    h = x
    i = 0
    while i < n_layers:
        k_in = h.shape[1]
        # Grow the fused group greedily while its resident footprint fits VMEM.
        j = i
        while j < n_layers and _group_vmem_bytes(
                k_in, [p[0].shape for p in params[i:j + 1]], tm) <= budget:
            j += 1
        if j == i:
            # Even a single layer's weight doesn't fit resident -> tiled fallback.
            w, b, alpha = params[i]
            h = dense_tiled(h, w, b, alpha,
                            apply_prelu=(i + 1) != n_layers, tiles=tiles)
            i += 1
        else:
            h = _mlp_fused_group(h, params[i:j], first_layer=i, n_total=n_layers,
                                 tm=tm, vmem_limit=vmem_limit)
            i = j
    return h


def mlp_simple_ref(x, params):
    """Pure-JAX reference of the same forward pass."""
    n_layers = len(params)
    for i, (w, b, alpha) in enumerate(params):
        x = x @ w + b
        if (i + 1) != n_layers:
            x = jnp.where(x > 0, x, alpha * x)
    return x


if __name__ == "__main__":
    key = jax.random.PRNGKey(0)
    kx, kp = jax.random.split(key)

    # Small deterministic example: batch=2, c_dim_list=[32, 64, 16]
    #  layer0: Linear(32 -> 64) + PReLU ; layer1: Linear(64 -> 16) (no activation)
    c_dim_list = [32, 64, 16]
    batch = 2
    x = jax.random.normal(kx, (batch, c_dim_list[0]), dtype=jnp.float32)
    params = init_mlp_params(kp, c_dim_list)

    logits = mlp_simple_forward(x, params)
    jax.block_until_ready(logits)

    ref = mlp_simple_ref(x, params)
    assert logits.shape == ref.shape, (logits.shape, ref.shape)
    assert jnp.allclose(logits, ref, rtol=2e-2, atol=2e-2), (
        "max abs err:", float(jnp.max(jnp.abs(logits - ref))))

    print("KERNEL_OK")
</pallas_src>

<mosaic_0001>
module attributes {stable_mosaic.version = 11 : i64} {
  func.func @_fused_mlp_kernel(%arg0: i32, %arg1: memref<2x32xf32, #tpu.memory_space<vmem>>, %arg2: memref<32x64xf32, #tpu.memory_space<vmem>>, %arg3: memref<1x64xf32, #tpu.memory_space<vmem>>, %arg4: memref<64x16xf32, #tpu.memory_space<vmem>>, %arg5: memref<1x16xf32, #tpu.memory_space<vmem>>, %arg6: memref<2xf32, #tpu.memory_space<smem>>, %arg7: memref<2x16xf32, #tpu.memory_space<vmem>>) attributes {dimension_semantics = [#tpu.dimension_semantics<parallel>], iteration_bounds = array<i64: 1>, scalar_prefetch = 0 : i64, scratch_operands = 0 : i64, tpu.core_type = #tpu.core_type<tc>, window_params = [{transform_indices = @transform_0, window_bounds = array<i64: 2, 32>}, {pipeline_mode = #tpu.pipeline_mode<synchronous>, transform_indices = @transform_1, window_bounds = array<i64: 32, 64>}, {pipeline_mode = #tpu.pipeline_mode<synchronous>, transform_indices = @transform_2, window_bounds = array<i64: 1, 64>}, {pipeline_mode = #tpu.pipeline_mode<synchronous>, transform_indices = @transform_3, window_bounds = array<i64: 64, 16>}, {pipeline_mode = #tpu.pipeline_mode<synchronous>, transform_indices = @transform_4, window_bounds = array<i64: 1, 16>}, {transform_indices = @transform_5, window_bounds = array<i64: 2>}, {transform_indices = @transform_6, window_bounds = array<i64: 2, 16>}]} {
    %c0 = arith.constant 0 : index
    %c0_0 = arith.constant 0 : index
    %0 = vector.load %arg1[%c0, %c0_0] : memref<2x32xf32, #tpu.memory_space<vmem>>, vector<2x32xf32>
    %c0_1 = arith.constant 0 : index
    %c0_2 = arith.constant 0 : index
    %1 = vector.load %arg2[%c0_1, %c0_2] : memref<32x64xf32, #tpu.memory_space<vmem>>, vector<32x64xf32>
    %c0_3 = arith.constant 0 : index
    %c0_4 = arith.constant 0 : index
    %2 = vector.load %arg3[%c0_3, %c0_4] : memref<1x64xf32, #tpu.memory_space<vmem>>, vector<1x64xf32>
    %cst = arith.constant dense<0.000000e+00> : vector<2x64xf32>
    %3 = tpu.matmul %0, %1, %cst {dimension_numbers = #tpu.dot_dimension_numbers<[1], [0], [0], [1], [0, 0, 1, 1], [], []>} : vector<2x32xf32>, vector<32x64xf32>, vector<2x64xf32> -> vector<2x64xf32>
    %4 = vector.broadcast %2 : vector<1x64xf32> to vector<2x64xf32>
    %5 = arith.addf %3, %4 : vector<2x64xf32>
    %c0_5 = arith.constant 0 : index
    %6 = memref.load %arg6[%c0_5] : memref<2xf32, #tpu.memory_space<smem>>
    %cst_6 = arith.constant 0.000000e+00 : f32
    %7 = vector.broadcast %cst_6 : f32 to vector<2x64xf32>
    %8 = arith.cmpf ogt, %5, %7 : vector<2x64xf32>
    %9 = vector.broadcast %6 : f32 to vector<2x64xf32>
    %10 = arith.mulf %9, %5 : vector<2x64xf32>
    %11 = arith.select %8, %5, %10 : vector<2x64xi1>, vector<2x64xf32>
    %c0_7 = arith.constant 0 : index
    %c0_8 = arith.constant 0 : index
    %12 = vector.load %arg4[%c0_7, %c0_8] : memref<64x16xf32, #tpu.memory_space<vmem>>, vector<64x16xf32>
    %c0_9 = arith.constant 0 : index
    %c0_10 = arith.constant 0 : index
    %13 = vector.load %arg5[%c0_9, %c0_10] : memref<1x16xf32, #tpu.memory_space<vmem>>, vector<1x16xf32>
    %cst_11 = arith.constant dense<0.000000e+00> : vector<2x16xf32>
    %14 = tpu.matmul %11, %12, %cst_11 {dimension_numbers = #tpu.dot_dimension_numbers<[1], [0], [0], [1], [0, 0, 1, 1], [], []>} : vector<2x64xf32>, vector<64x16xf32>, vector<2x16xf32> -> vector<2x16xf32>
    %15 = vector.broadcast %13 : vector<1x16xf32> to vector<2x16xf32>
    %16 = arith.addf %14, %15 : vector<2x16xf32>
    %c0_12 = arith.constant 0 : index
    %c0_13 = arith.constant 0 : index
    %17 = vector.load %arg7[%c0_12, %c0_13] : memref<2x16xf32, #tpu.memory_space<vmem>>, vector<2x16xf32>
    tpu.vector_store %arg7[%c0_12, %c0_13], %16 {strides = array<i32>} : memref<2x16xf32, #tpu.memory_space<vmem>>, vector<2x16xf32>,
    return
  }
  func.func @transform_0(%arg0: i32) -> (i32, i32) {
    %c0_i32 = arith.constant 0 : i32
    %c0_i32_0 = arith.constant 0 : i32
    return %arg0, %c0_i32 : i32, i32
  }
  func.func @transform_1(%arg0: i32) -> (i32, i32) {
    %c0_i32 = arith.constant 0 : i32
    %c0_i32_0 = arith.constant 0 : i32
    %c0_i32_1 = arith.constant 0 : i32
    return %c0_i32, %c0_i32_0 : i32, i32
  }
  func.func @transform_2(%arg0: i32) -> (i32, i32) {
    %c0_i32 = arith.constant 0 : i32
    %c0_i32_0 = arith.constant 0 : i32
    %c0_i32_1 = arith.constant 0 : i32
    return %c0_i32, %c0_i32_0 : i32, i32
  }
  func.func @transform_3(%arg0: i32) -> (i32, i32) {
    %c0_i32 = arith.constant 0 : i32
    %c0_i32_0 = arith.constant 0 : i32
    %c0_i32_1 = arith.constant 0 : i32
    return %c0_i32, %c0_i32_0 : i32, i32
  }
  func.func @transform_4(%arg0: i32) -> (i32, i32) {
    %c0_i32 = arith.constant 0 : i32
    %c0_i32_0 = arith.constant 0 : i32
    %c0_i32_1 = arith.constant 0 : i32
    return %c0_i32, %c0_i32_0 : i32, i32
  }
  func.func @transform_5(%arg0: i32) -> i32 {
    %c0_i32 = arith.constant 0 : i32
    %c0_i32_0 = arith.constant 0 : i32
    return %c0_i32 : i32
  }
  func.func @transform_6(%arg0: i32) -> (i32, i32) {
    %c0_i32 = arith.constant 0 : i32
    %c0_i32_0 = arith.constant 0 : i32
    return %arg0, %c0_i32 : i32, i32
  }
}

</mosaic_0001>

<llo_original>
// kernel: tpu_custom_call.1
$region0: #{tpu_custom_call.1}
  #allocation0 [shape = 'u32[]', space=smem, size = 0x4, offset = 0x4, fixed_abs, tag = 'smem constant byte address 0x4 - core index']
  #allocation1 [shape = 'u32[144,128]{1,0:T(1,128)}', space=vmem, size = 0x12000, scoped, tag = 'internal scratch']
  %s0 = inlined_call_operand.vmem [shape: f32[2,32], index: 0, kind: input, shape index: {}]
  %s1 = inlined_call_operand.vmem [shape: f32[32,64], index: 1, kind: input, shape index: {}]
  %s2 = inlined_call_operand.vmem [shape: f32[1,64], index: 2, kind: input, shape index: {}]
  %s3 = inlined_call_operand.vmem [shape: f32[64,16], index: 3, kind: input, shape index: {}]
  %s4 = inlined_call_operand.vmem [shape: f32[1,16], index: 4, kind: input, shape index: {}]
  %s5 = inlined_call_operand.vmem [shape: f32[2], index: 5, kind: input, shape index: {}]
  %s6 = inlined_call_operand.hbm [shape: f32[2,16], index: 6, kind: output, shape index: {}]
  %s7 = sld [smem:[#allocation0]]
  $region38: #{tpu_custom_call.1} parent=0
    _
  %s9 = ssub.s32 1, %s7
  %s10 = scalar_select 0, %s9, %s7
  $region1: #{tpu_custom_call.1} parent=0
    #allocation2 [shape = 'u8[512]{0}', space=smem, size = 0x200, scoped, tag = 'input window, operand 5, single buffered']
    #allocation3 [shape = 's32[1]{0}', space=sflag, size = 0x4, scoped, tag = 'scoped memory for tpu_custom_call.1']
    #allocation4 [shape = 's32[1]{0}', space=sflag, size = 0x4, scoped, tag = 'scoped memory for tpu_custom_call.1']
    #allocation5 [shape = 'u8[1024]{0}', space=vmem, size = 0x400, scoped, tag = 'output window, operand 0, single buffered']
    %11 = vsyncpa [#allocation4], 0
    %12 = vsyncpa [#allocation3], 0
    // Predicated region
    $region2: #{tpu_custom_call.1} parent=1 // pred_check
      _
    $region3: #{tpu_custom_call.1} parent=1 // pred_check_branch
      %14 = sbr.rel (0) target = $region5
    $region4: #{tpu_custom_call.1} parent=1 // pred_region
      _
    $region5: #{tpu_custom_call.1} parent=1 // pred_fallthru
      _
    // Predicated region
    $region6: #{tpu_custom_call.1} parent=1 // pred_check
      _
    $region7: #{tpu_custom_call.1} parent=1 // pred_check_branch
      %16 = sbr.rel (0) target = $region9
    $region8: #{tpu_custom_call.1} parent=1 // pred_region
      _
    $region9: #{tpu_custom_call.1} parent=1 // pred_fallthru
      _
    // Predicated region
    $region10: #{tpu_custom_call.1} parent=1 // pred_check
      _
    $region11: #{tpu_custom_call.1} parent=1 // pred_check_branch
      %18 = sbr.rel (0) target = $region13
    $region12: #{tpu_custom_call.1} parent=1 // pred_region
      _
    $region13: #{tpu_custom_call.1} parent=1 // pred_fallthru
      _
    // Predicated region
    $region14: #{tpu_custom_call.1} parent=1 // pred_check
      _
    $region15: #{tpu_custom_call.1} parent=1 // pred_check_branch
      %20 = sbr.rel (0) target = $region17
    $region16: #{tpu_custom_call.1} parent=1 // pred_region
      _
    $region17: #{tpu_custom_call.1} parent=1 // pred_fallthru
      _
    // Predicated region
    $region18: #{tpu_custom_call.1} parent=1 // pred_check
      _
    $region19: #{tpu_custom_call.1} parent=1 // pred_check_branch
      %22 = sbr.rel (0) target = $region21
    $region20: #{tpu_custom_call.1} parent=1 // pred_region
      _
    $region21: #{tpu_custom_call.1} parent=1 // pred_fallthru
      _
    // Predicated region
    $region22: #{tpu_custom_call.1} parent=1 // pred_check
      _
    $region23: #{tpu_custom_call.1} parent=1 // pred_check_branch
      %24 = sbr.rel (0) target = $region25
    $region24: #{tpu_custom_call.1} parent=1 // pred_region
      %s26 = ssub.s32 16, 16
      %27 = vsyncadd [#allocation4], %s26
      %s29 = sshll.u32 %s5, 4
      %s30 = int_to_ptr.vmem [resolvable:$true] %s29
      %32 = dma.vmem_to_smem %s30, 16, [#allocation2], [#allocation4]
    $region25: #{tpu_custom_call.1} parent=1 // pred_fallthru
      _
    // Predicated region
    $region26: #{tpu_custom_call.1} parent=1 // pred_check
      _
    $region27: #{tpu_custom_call.1} parent=1 // pred_check_branch
      %34 = sbr.rel (0) target = $region29
    $region28: #{tpu_custom_call.1} parent=1 // pred_region
      %35 = dma.done [#allocation4], 16
    $region29: #{tpu_custom_call.1} parent=1 // pred_fallthru
      _
    %36 = sfence
    %v37 = vld [vmem:[%s0] sm:$0x3]
    %v38 = vld [vmem:[%s1] sm:$0xff]
    %v39 = vld [vmem:[%s1 + $0x8] sm:$0xff]
    %v40 = vld [vmem:[%s1 + $0x10] sm:$0xff]
    %v41 = vld [vmem:[%s1 + $0x18] sm:$0xff]
    %v42 = vld [vmem:[%s2] sm:$0x1]
    %v44 = vlaneseq
    %v45 = vshrl.u32 %v44, 7
    %v46 = vsub.s32 0, %v45
    %v47 = vrot.slane %v42, %v46
    %vm49 = vcmask 261120
    %v51 = vsel %vm49, %v37, 0
    %53 = vmatprep.subr.mxu0 0.0
    %54 = vmatpush1.msra.mxu0 0.0
    %55 = vmatprep.subr.mxu0 0.0
    %56 = vmatpush1.msra.mxu0 0.0
    %57 = vmatprep.subr.mxu0 0.0
    %58 = vmatpush1.msra.mxu0 0.0
    %59 = vmatprep.subr.mxu0 0.0
    %60 = vmatpush1.msra.mxu0 0.0
    %61 = vmatprep.subr.mxu0 0.0
    %62 = vmatpush1.msra.mxu0 0.0
    %63 = vmatprep.subr.mxu0 0.0
    %64 = vmatpush1.msra.mxu0 0.0
    %65 = vmatprep.subr.mxu0 0.0
    %66 = vmatpush1.msra.mxu0 0.0
    %67 = vmatprep.subr.mxu0 0.0
    %68 = vmatpush1.msra.mxu0 0.0
    %69 = vmatprep.subr.mxu0 0.0
    %70 = vmatpush1.msra.mxu0 0.0
    %71 = vmatprep.subr.mxu0 0.0
    %72 = vmatpush1.msra.mxu0 0.0
    %73 = vmatprep.subr.mxu0 0.0
    %74 = vmatpush1.msra.mxu0 0.0
    %75 = vmatprep.subr.mxu0 0.0
    %76 = vmatpush1.msra.mxu0 0.0
    %77 = vmatprep.subr.mxu0 0.0
    %78 = vmatpush1.msra.mxu0 %v41
    %79 = vmatprep.subr.mxu0 0.0
    %80 = vmatpush1.msra.mxu0 %v40
    %81 = vmatprep.subr.mxu0 0.0
    %82 = vmatpush1.msra.mxu0 %v39
    %83 = vmatprep.subr.mxu0 0.0
    %84 = vmatpush1.msra.mxu0 %v38
    %85 = vmatprep.subr.mxu0 0.0
    %86 = vmatpush2.msra.mxu0 0.0
    %87 = vmatprep.subr.mxu0 0.0
    %88 = vmatpush2.msra.mxu0 0.0
    %89 = vmatprep.subr.mxu0 0.0
    %90 = vmatpush2.msra.mxu0 0.0
    %91 = vmatprep.subr.mxu0 0.0
    %92 = vmatpush2.msra.mxu0 0.0
    %93 = vmatprep.subr.mxu0 0.0
    %94 = vmatpush2.msra.mxu0 0.0
    %95 = vmatprep.subr.mxu0 0.0
    %96 = vmatpush2.msra.mxu0 0.0
    %97 = vmatprep.subr.mxu0 0.0
    %98 = vmatpush2.msra.mxu0 0.0
    %99 = vmatprep.subr.mxu0 0.0
    %100 = vmatpush2.msra.mxu0 0.0
    %101 = vmatprep.subr.mxu0 0.0
    %102 = vmatpush2.msra.mxu0 0.0
    %103 = vmatprep.subr.mxu0 0.0
    %104 = vmatpush2.msra.mxu0 0.0
    %105 = vmatprep.subr.mxu0 0.0
    %106 = vmatpush2.msra.mxu0 0.0
    %107 = vmatprep.subr.mxu0 0.0
    %108 = vmatpush2.msra.mxu0 0.0
    %109 = vmatprep.subr.mxu0 0.0
    %110 = vmatpush2.msra.mxu0 0.0
    %111 = vmatprep.subr.mxu0 0.0
    %112 = vmatpush2.msra.mxu0 0.0
    %113 = vmatprep.subr.mxu0 0.0
    %114 = vmatpush2.msra.mxu0 0.0
    %115 = vmatprep.subr.mxu0 0.0
    %116 = vmatpush2.msra.mxu0 0.0
    %117 = vmatprep.mubr.f32.mxu0 0.0
    %118 = vmatmul.mubr.f32.gmra.mxu0 %v51
    %v119 = vpop.f32.mrf.mxu0
    %v120 = vadd.f32 %v47, %v119
    %v121 = vpop.f32.mrf.mxu0
    %122 = vdwg.mxu0
    %s123 = sld [smem:[#allocation2]]
    %vm124 = vcmp.gt.f32.partialorder %v120, 0.0
    %v125 = vstv %s123
    %v126 = vmul.f32 %v125, %v120
    %v127 = vsel %vm124, %v120, %v126
    %v128 = vld [vmem:[%s3] sm:$0xff]
    %v129 = vld [vmem:[%s3 + $0x8] sm:$0xff]
    %v130 = vld [vmem:[%s3 + $0x10] sm:$0xff]
    %v131 = vld [vmem:[%s3 + $0x18] sm:$0xff]
    %v132 = vld [vmem:[%s3 + $0x20] sm:$0xff]
    %v133 = vld [vmem:[%s3 + $0x28] sm:$0xff]
    %v134 = vld [vmem:[%s3 + $0x30] sm:$0xff]
    %v135 = vld [vmem:[%s3 + $0x38] sm:$0xff]
    %v136 = vld [vmem:[%s4] sm:$0x1]
    %v138 = vlaneseq
    %v139 = vshrl.u32 %v138, 7
    %v140 = vsub.s32 0, %v139
    %v141 = vrot.slane %v136, %v140
    %vm143 = vcmask 523264
    %v145 = vsel %vm143, %v127, 0
    %147 = vmatprep.subr.mxu0 0.0
    %148 = vmatpush1.msra.mxu0 0.0
    %149 = vmatprep.subr.mxu0 0.0
    %150 = vmatpush1.msra.mxu0 0.0
    %151 = vmatprep.subr.mxu0 0.0
    %152 = vmatpush1.msra.mxu0 0.0
    %153 = vmatprep.subr.mxu0 0.0
    %154 = vmatpush1.msra.mxu0 0.0
    %155 = vmatprep.subr.mxu0 0.0
    %156 = vmatpush1.msra.mxu0 0.0
    %157 = vmatprep.subr.mxu0 0.0
    %158 = vmatpush1.msra.mxu0 0.0
    %159 = vmatprep.subr.mxu0 0.0
    %160 = vmatpush1.msra.mxu0 0.0
    %161 = vmatprep.subr.mxu0 0.0
    %162 = vmatpush1.msra.mxu0 0.0
    %163 = vmatprep.subr.mxu0 0.0
    %164 = vmatpush1.msra.mxu0 %v135
    %165 = vmatprep.subr.mxu0 0.0
    %166 = vmatpush1.msra.mxu0 %v134
    %167 = vmatprep.subr.mxu0 0.0
    %168 = vmatpush1.msra.mxu0 %v133
    %169 = vmatprep.subr.mxu0 0.0
    %170 = vmatpush1.msra.mxu0 %v132
    %171 = vmatprep.subr.mxu0 0.0
    %172 = vmatpush1.msra.mxu0 %v131
    %173 = vmatprep.subr.mxu0 0.0
    %174 = vmatpush1.msra.mxu0 %v130
    %175 = vmatprep.subr.mxu0 0.0
    %176 = vmatpush1.msra.mxu0 %v129
    %177 = vmatprep.subr.mxu0 0.0
    %178 = vmatpush1.msra.mxu0 %v128
    %179 = vmatprep.subr.mxu0 0.0
    %180 = vmatpush2.msra.mxu0 0.0
    %181 = vmatprep.subr.mxu0 0.0
    %182 = vmatpush2.msra.mxu0 0.0
    %183 = vmatprep.subr.mxu0 0.0
    %184 = vmatpush2.msra.mxu0 0.0
    %185 = vmatprep.subr.mxu0 0.0
    %186 = vmatpush2.msra.mxu0 0.0
    %187 = vmatprep.subr.mxu0 0.0
    %188 = vmatpush2.msra.mxu0 0.0
    %189 = vmatprep.subr.mxu0 0.0
    %190 = vmatpush2.msra.mxu0 0.0
    %191 = vmatprep.subr.mxu0 0.0
    %192 = vmatpush2.msra.mxu0 0.0
    %193 = vmatprep.subr.mxu0 0.0
    %194 = vmatpush2.msra.mxu0 0.0
    %195 = vmatprep.subr.mxu0 0.0
    %196 = vmatpush2.msra.mxu0 0.0
    %197 = vmatprep.subr.mxu0 0.0
    %198 = vmatpush2.msra.mxu0 0.0
    %199 = vmatprep.subr.mxu0 0.0
    %200 = vmatpush2.msra.mxu0 0.0
    %201 = vmatprep.subr.mxu0 0.0
    %202 = vmatpush2.msra.mxu0 0.0
    %203 = vmatprep.subr.mxu0 0.0
    %204 = vmatpush2.msra.mxu0 0.0
    %205 = vmatprep.subr.mxu0 0.0
    %206 = vmatpush2.msra.mxu0 0.0
    %207 = vmatprep.subr.mxu0 0.0
    %208 = vmatpush2.msra.mxu0 0.0
    %209 = vmatprep.subr.mxu0 0.0
    %210 = vmatpush2.msra.mxu0 0.0
    %211 = vmatprep.mubr.f32.mxu0 0.0
    %212 = vmatmul.mubr.f32.gmra.mxu0 %v145
    %v213 = vpop.f32.mrf.mxu0
    %v214 = vadd.f32 %v141, %v213
    %v215 = vpop.f32.mrf.mxu0
    %216 = vdwg.mxu0
    %vm217 = vcmask 123904
    %218 = vst.msk [vmem:[#allocation5] sm:$0x3] %vm217, %v214
    // Predicated region
    $region30: #{tpu_custom_call.1} parent=1 // pred_check
      _
    $region31: #{tpu_custom_call.1} parent=1 // pred_check_branch
      %220 = sbr.rel (0) target = $region33
    $region32: #{tpu_custom_call.1} parent=1 // pred_region
      %s222 = ssub.s32 32, 32
      %223 = vsyncadd [#allocation3], %s222
      %s225 = sshll.u32 [#allocation5], 4
      %s226 = int_to_ptr.vmem [resolvable:$true] %s225
      %228 = dma.vmem_to_hbm [thread:$0]  %s226, 32, %s6, [#allocation3]
    $region33: #{tpu_custom_call.1} parent=1 // pred_fallthru
      _
    // Predicated region
    $region34: #{tpu_custom_call.1} parent=1 // pred_check
      _
    $region35: #{tpu_custom_call.1} parent=1 // pred_check_branch
      %230 = sbr.rel (0) target = $region37
    $region36: #{tpu_custom_call.1} parent=1 // pred_region
      %231 = dma.done [#allocation3], 32
    $region37: #{tpu_custom_call.1} parent=1 // pred_fallthru
      _
    %232 = vsyncpa [#allocation3], 1
    %233 = vsyncpa [#allocation4], 1

</llo_original>
